<compile_context>
chip_gen: v7x
topology: tpu7x:2x2x1
jax: 0.10.0
libtpu: 0.0.40
codegen_flags: <defaults>
</compile_context>

<pallas_src>
import functools

import jax
import jax.numpy as jnp
from jax.experimental import pallas as pl
from jax.experimental.pallas import tpu as pltpu


def _downsample_kernel(inv_side_ref, coords_ref, bits_ref, out_ref):
    coords = coords_ref[...]                                  # (TB, TN) f32
    bits = bits_ref[...]                                      # (TB, TN) u32

    # Uniform in [0, 1): exponent trick on the top 23 bits (bits 9..31).
    mant = (bits >> jnp.uint32(9)) | jnp.uint32(0x3F800000)
    u = jax.lax.bitcast_convert_type(mant, jnp.float32) - jnp.float32(1.0)
    # Bernoulli(1/2) from bit 0 (disjoint from the bits used for u).
    neg = (bits & jnp.uint32(1)) == jnp.uint32(1)

    r = jnp.float32(1.0) - jnp.sqrt(u)                        # Z; -r is Y
    q = jnp.where(neg, -r, r)

    # Per-channel 1/sidelength: even lanes are u (H), odd lanes are v (W).
    tb, tn = out_ref.shape
    lane = jax.lax.broadcasted_iota(jnp.int32, (tb, tn), 1)
    inv = jnp.where((lane & 1) == 0, inv_side_ref[0], inv_side_ref[1])

    out_ref[...] = coords + q * inv


def _pick_tile(full, unit, max_tile):
    if full <= max_tile:
        return full                       # full extent -> always a legal block
    return (max_tile // unit) * unit      # multiple of the (8,128) tiling unit


@functools.partial(jax.jit, static_argnames=("downsample",))
def image_downsampling_forward(coords, sidelength, key, downsample=True):
    """coords: (B, N, 2) float; sidelength: (2,) float (H, W); key: PRNG key."""
    if not downsample:
        return coords

    B, N, C = coords.shape
    assert C == 2
    L = 2 * N

    coords2d = coords.reshape(B, L).astype(jnp.float32)        # lane-dense view
    bits = jax.random.bits(key, (B, L), dtype=jnp.uint32)      # one draw / element
    inv_side = (1.0 / sidelength.astype(jnp.float32)).reshape(2)

    TB = _pick_tile(B, 8, 256)
    TN = _pick_tile(L, 128, 2048)
    grid = (pl.cdiv(B, TB), pl.cdiv(L, TN))

    out2d = pl.pallas_call(
        _downsample_kernel,
        out_shape=jax.ShapeDtypeStruct((B, L), jnp.float32),
        grid=grid,
        in_specs=[
            pl.BlockSpec(memory_space=pltpu.SMEM),             # 1/sidelength (2,)
            pl.BlockSpec((TB, TN), lambda i, j: (i, j)),       # coords tile
            pl.BlockSpec((TB, TN), lambda i, j: (i, j)),       # random bits tile
        ],
        out_specs=pl.BlockSpec((TB, TN), lambda i, j: (i, j)),
        compiler_params=pltpu.CompilerParams(
            dimension_semantics=("parallel", "parallel")),
    )(inv_side, coords2d, bits)

    return out2d.reshape(B, N, 2).astype(coords.dtype)


if __name__ == "__main__":
    key = jax.random.PRNGKey(0)
    k_coords, k_noise = jax.random.split(key)

    # sidelength = 16 -> N = 16*16 = 256 samples per batch element (lane width 512).
    B, side = 2, 16
    N = side * side
    coords = jax.random.uniform(k_coords, (B, N, 2), dtype=jnp.float32,
                                minval=-1.0, maxval=1.0)
    sidelength = jnp.array([side, side], dtype=jnp.float32)

    out = image_downsampling_forward(coords, sidelength, k_noise, downsample=True)
    out = jax.block_until_ready(out)

    # sanity: perturbation magnitude bounded by 1/sidelength
    delta = out - coords
    assert out.shape == coords.shape
    assert bool(jnp.all(jnp.abs(delta) <= (1.0 / sidelength) + 1e-6))

    # downsample=False path: identity
    out_id = jax.block_until_ready(
        image_downsampling_forward(coords, sidelength, k_noise, downsample=False))
    assert bool(jnp.all(out_id == coords))

    print("KERNEL_OK")
</pallas_src>

<mosaic_0001>
module attributes {stable_mosaic.version = 11 : i64} {
  func.func @_downsample_kernel(%arg0: i32, %arg1: i32, %arg2: memref<2xf32, #tpu.memory_space<smem>>, %arg3: memref<2x512xf32, #tpu.memory_space<vmem>>, %arg4: memref<2x512xi32, #tpu.memory_space<vmem>>, %arg5: memref<2x512xf32, #tpu.memory_space<vmem>>) attributes {dimension_semantics = [#tpu.dimension_semantics<parallel>, #tpu.dimension_semantics<parallel>], iteration_bounds = array<i64: 1, 1>, scalar_prefetch = 0 : i64, scratch_operands = 0 : i64, tpu.core_type = #tpu.core_type<tc>, window_params = [{transform_indices = @transform_0, window_bounds = array<i64: 2>}, {transform_indices = @transform_1, window_bounds = array<i64: 2, 512>}, {transform_indices = @transform_2, window_bounds = array<i64: 2, 512>}, {transform_indices = @transform_3, window_bounds = array<i64: 2, 512>}]} {
    %c0 = arith.constant 0 : index
    %c0_0 = arith.constant 0 : index
    %0 = vector.load %arg3[%c0, %c0_0] : memref<2x512xf32, #tpu.memory_space<vmem>>, vector<2x512xf32>
    %c0_1 = arith.constant 0 : index
    %c0_2 = arith.constant 0 : index
    %1 = vector.load %arg4[%c0_1, %c0_2] : memref<2x512xi32, #tpu.memory_space<vmem>>, vector<2x512xi32>
    %c9_i32 = arith.constant 9 : i32
    %2 = vector.broadcast %c9_i32 : i32 to vector<2x512xi32>
    %3 = arith.shrui %1, %2 : vector<2x512xi32>
    %c1065353216_i32 = arith.constant 1065353216 : i32
    %4 = vector.broadcast %c1065353216_i32 : i32 to vector<2x512xi32>
    %5 = arith.ori %3, %4 : vector<2x512xi32>
    %6 = tpu.bitcast %5 : vector<2x512xi32> -> vector<2x512xf32>
    %cst = arith.constant 1.000000e+00 : f32
    %7 = vector.broadcast %cst : f32 to vector<2x512xf32>
    %8 = arith.subf %6, %7 : vector<2x512xf32>
    %c1_i32 = arith.constant 1 : i32
    %9 = vector.broadcast %c1_i32 : i32 to vector<2x512xi32>
    %10 = arith.andi %1, %9 : vector<2x512xi32>
    %c1_i32_3 = arith.constant 1 : i32
    %11 = vector.broadcast %c1_i32_3 : i32 to vector<2x512xi32>
    %12 = arith.cmpi eq, %10, %11 : vector<2x512xi32>
    %13 = math.sqrt %8 : vector<2x512xf32>
    %cst_4 = arith.constant 1.000000e+00 : f32
    %14 = vector.broadcast %cst_4 : f32 to vector<2x512xf32>
    %15 = arith.subf %14, %13 : vector<2x512xf32>
    %cst_5 = arith.constant 0.000000e+00 : f32
    %16 = vector.broadcast %cst_5 : f32 to vector<2x512xf32>
    %17 = arith.subf %16, %15 : vector<2x512xf32>
    %18 = arith.select %12, %17, %15 : vector<2x512xi1>, vector<2x512xf32>
    %19 = tpu.iota {dimensions = array<i32: 1>} : vector<2x512xi32>
    %c1_i32_6 = arith.constant 1 : i32
    %20 = vector.broadcast %c1_i32_6 : i32 to vector<2x512xi32>
    %21 = arith.andi %19, %20 : vector<2x512xi32>
    %c0_i32 = arith.constant 0 : i32
    %22 = vector.broadcast %c0_i32 : i32 to vector<2x512xi32>
    %23 = arith.cmpi eq, %21, %22 : vector<2x512xi32>
    %c0_7 = arith.constant 0 : index
    %24 = memref.load %arg2[%c0_7] : memref<2xf32, #tpu.memory_space<smem>>
    %c1 = arith.constant 1 : index
    %25 = memref.load %arg2[%c1] : memref<2xf32, #tpu.memory_space<smem>>
    %26 = vector.broadcast %24 : f32 to vector<2x512xf32>
    %27 = vector.broadcast %25 : f32 to vector<2x512xf32>
    %28 = arith.select %23, %26, %27 : vector<2x512xi1>, vector<2x512xf32>
    %29 = arith.mulf %18, %28 : vector<2x512xf32>
    %30 = arith.addf %0, %29 : vector<2x512xf32>
    %c0_8 = arith.constant 0 : index
    %c0_9 = arith.constant 0 : index
    %31 = vector.load %arg5[%c0_8, %c0_9] : memref<2x512xf32, #tpu.memory_space<vmem>>, vector<2x512xf32>
    tpu.vector_store %arg5[%c0_8, %c0_9], %30 {strides = array<i32>} : memref<2x512xf32, #tpu.memory_space<vmem>>, vector<2x512xf32>,
    return
  }
  func.func @transform_0(%arg0: i32, %arg1: i32) -> i32 {
    %c0_i32 = arith.constant 0 : i32
    %c0_i32_0 = arith.constant 0 : i32
    return %c0_i32 : i32
  }
  func.func @transform_1(%arg0: i32, %arg1: i32) -> (i32, i32) {
    %c0_i32 = arith.constant 0 : i32
    return %arg0, %arg1 : i32, i32
  }
  func.func @transform_2(%arg0: i32, %arg1: i32) -> (i32, i32) {
    %c0_i32 = arith.constant 0 : i32
    return %arg0, %arg1 : i32, i32
  }
  func.func @transform_3(%arg0: i32, %arg1: i32) -> (i32, i32) {
    %c0_i32 = arith.constant 0 : i32
    return %arg0, %arg1 : i32, i32
  }
}

</mosaic_0001>

<llo_original>
// kernel: image_downsampling_forward.1
$region0: #{image_downsampling_forward.1}
  #allocation0 [shape = 'u32[]', space=smem, size = 0x4, offset = 0x4, fixed_abs, tag = 'smem constant byte address 0x4 - core index']
  #allocation1 [shape = 'u32[144,128]{1,0:T(1,128)}', space=vmem, size = 0x12000, scoped, tag = 'internal scratch']
  %s0 = inlined_call_operand.vmem [shape: f32[2], index: 0, kind: input, shape index: {}]
  %s1 = inlined_call_operand.vmem [shape: f32[2,512], index: 1, kind: input, shape index: {}]
  %s2 = inlined_call_operand.vmem [shape: u32[2,512], index: 2, kind: input, shape index: {}]
  %s3 = inlined_call_operand.vmem [shape: f32[2,512], index: 3, kind: output, shape index: {}]
  %s4 = sld [smem:[#allocation0]]
  $region26: #{image_downsampling_forward.1} parent=0
    _
  %s6 = ssub.s32 1, %s4
  %s7 = scalar_select 0, %s6, %s4
  $region1: #{image_downsampling_forward.1} parent=0
    #allocation2 [shape = 'u8[512]{0}', space=smem, size = 0x200, scoped, tag = 'input window, operand 0, single buffered']
    #allocation3 [shape = 's32[1]{0}', space=sflag, size = 0x4, scoped, tag = 'scoped memory for image_downsampling_forward.1']
    %8 = vsyncpa [#allocation3], 0
    // Predicated region
    $region2: #{image_downsampling_forward.1} parent=1 // pred_check
      _
    $region3: #{image_downsampling_forward.1} parent=1 // pred_check_branch
      %10 = sbr.rel (0) target = $region5
    $region4: #{image_downsampling_forward.1} parent=1 // pred_region
      %s12 = ssub.s32 16, 16
      %13 = vsyncadd [#allocation3], %s12
      %s15 = sshll.u32 %s0, 4
      %s16 = int_to_ptr.vmem [resolvable:$true] %s15
      %18 = dma.vmem_to_smem %s16, 16, [#allocation2], [#allocation3]
    $region5: #{image_downsampling_forward.1} parent=1 // pred_fallthru
      _
    // Predicated region
    $region6: #{image_downsampling_forward.1} parent=1 // pred_check
      _
    $region7: #{image_downsampling_forward.1} parent=1 // pred_check_branch
      %20 = sbr.rel (0) target = $region9
    $region8: #{image_downsampling_forward.1} parent=1 // pred_region
      _
    $region9: #{image_downsampling_forward.1} parent=1 // pred_fallthru
      _
    // Predicated region
    $region10: #{image_downsampling_forward.1} parent=1 // pred_check
      _
    $region11: #{image_downsampling_forward.1} parent=1 // pred_check_branch
      %22 = sbr.rel (0) target = $region13
    $region12: #{image_downsampling_forward.1} parent=1 // pred_region
      _
    $region13: #{image_downsampling_forward.1} parent=1 // pred_fallthru
      _
    // Predicated region
    $region14: #{image_downsampling_forward.1} parent=1 // pred_check
      _
    $region15: #{image_downsampling_forward.1} parent=1 // pred_check_branch
      %24 = sbr.rel (0) target = $region17
    $region16: #{image_downsampling_forward.1} parent=1 // pred_region
      %25 = dma.done [#allocation3], 16
    $region17: #{image_downsampling_forward.1} parent=1 // pred_fallthru
      _
    %26 = sfence
    %v27 = vld [vmem:[%s1] sm:$0xff]
    %v28 = vld [vmem:[%s2] sm:$0xff]
    %v29 = vshrl.u32 %v28, 9
    %v30 = vor.u32 %v29, 1065353216
    %v31 = vcombine.high %v30, %v30
    %v33 = vunpack.c.l.s4 1983009808
    %v34 = vunpack.c.0.s8 %v33
    %v35 = vlaneseq
    %v36 = vshrl.u32 %v35, 7
    %v37 = vsub.s32 %v34, %v36
    %v38 = vrot.slane %v30, %v37
    %v40 = vunpack.c.l.s4 1983009808
    %v41 = vunpack.c.0.s8 %v40
    %v42 = vlaneseq
    %v43 = vshrl.u32 %v42, 7
    %v44 = vsub.s32 %v41, %v43
    %v45 = vrot.slane %v31, %v44
    %v46 = vcombine.high %v38, %v38
    %v47 = vcombine.high %v45, %v45
    %v52 = vsub.f32 %v38, 1.0
    %v53 = vsub.f32 %v46, 1.0
    %v54 = vsub.f32 %v45, 1.0
    %v55 = vsub.f32 %v47, 1.0
    %v56 = vand.u32 %v28, 1
    %vm57 = vcmp.eq.s32.totalorder %v56, 1
    %v58 = vrsqrt.pop %v52
    %v59 = vmul.f32 %v52, %v58
    %vm60 = vcmp.eq.f32.partialorder %v52, inf
    %v61 = vsel %vm60, %v52, %v59
    %vm62 = vcmp.eq.f32.partialorder %v52, 0.0
    %v63 = vand.u32 %v52, 2147483648
    %v64 = vsel %vm62, %v63, %v61
    %v65 = vrsqrt.pop %v53
    %v66 = vmul.f32 %v53, %v65
    %vm67 = vcmp.eq.f32.partialorder %v53, inf
    %v68 = vsel %vm67, %v53, %v66
    %vm69 = vcmp.eq.f32.partialorder %v53, 0.0
    %v70 = vand.u32 %v53, 2147483648
    %v71 = vsel %vm69, %v70, %v68
    %v72 = vrsqrt.pop %v54
    %v73 = vmul.f32 %v54, %v72
    %vm74 = vcmp.eq.f32.partialorder %v54, inf
    %v75 = vsel %vm74, %v54, %v73
    %vm76 = vcmp.eq.f32.partialorder %v54, 0.0
    %v77 = vand.u32 %v54, 2147483648
    %v78 = vsel %vm76, %v77, %v75
    %v79 = vrsqrt.pop %v55
    %v80 = vmul.f32 %v55, %v79
    %vm81 = vcmp.eq.f32.partialorder %v55, inf
    %v82 = vsel %vm81, %v55, %v80
    %vm83 = vcmp.eq.f32.partialorder %v55, 0.0
    %v84 = vand.u32 %v55, 2147483648
    %v85 = vsel %vm83, %v84, %v82
    %v86 = vsub.f32 1.0, %v64
    %v87 = vsub.f32 1.0, %v71
    %v88 = vsub.f32 1.0, %v78
    %v89 = vsub.f32 1.0, %v85
    %v90 = vsub.f32 0.0, %v86
    %v91 = vsub.f32 0.0, %v87
    %v92 = vsub.f32 0.0, %v88
    %v93 = vsub.f32 0.0, %v89
    %v98 = vcombine.low %v90, %v91
    %v99 = vcombine.low %v92, %v93
    %v101 = vunpack.c.l.s4 1983009808
    %v102 = vunpack.c.0.s8 %v101
    %v103 = vlaneseq
    %v104 = vshrl.u32 %v103, 7
    %v105 = vsub.s32 %v102, %v104
    %v106 = vrot.slane %v98, %v105
    %v108 = vunpack.c.l.s4 1983009808
    %v109 = vunpack.c.0.s8 %v108
    %v110 = vlaneseq
    %v111 = vshrl.u32 %v110, 7
    %v112 = vsub.s32 %v109, %v111
    %v113 = vrot.slane %v99, %v112
    %v114 = vcombine.low %v106, %v113
    %v120 = vcombine.low %v86, %v87
    %v121 = vcombine.low %v88, %v89
    %v123 = vunpack.c.l.s4 1983009808
    %v124 = vunpack.c.0.s8 %v123
    %v125 = vlaneseq
    %v126 = vshrl.u32 %v125, 7
    %v127 = vsub.s32 %v124, %v126
    %v128 = vrot.slane %v120, %v127
    %v130 = vunpack.c.l.s4 1983009808
    %v131 = vunpack.c.0.s8 %v130
    %v132 = vlaneseq
    %v133 = vshrl.u32 %v132, 7
    %v134 = vsub.s32 %v131, %v133
    %v135 = vrot.slane %v121, %v134
    %v136 = vcombine.low %v128, %v135
    %v138 = vsel %vm57, %v114, %v136
    %v139 = vlaneseq
    %v140 = vand.u32 %v139, 127
    %v141 = vadd.s32 %v140, 128
    %v142 = vadd.s32 %v140, 256
    %v143 = vadd.s32 %v140, 384
    %v144 = vand.u32 %v140, 1
    %v145 = vand.u32 %v141, 1
    %v146 = vand.u32 %v142, 1
    %v147 = vand.u32 %v143, 1
    %vm148 = vcmp.eq.s32.totalorder %v144, 0
    %vm149 = vcmp.eq.s32.totalorder %v145, 0
    %vm150 = vcmp.eq.s32.totalorder %v146, 0
    %vm151 = vcmp.eq.s32.totalorder %v147, 0
    %s152 = sld [smem:[#allocation2]]
    %s153 = sld [smem:[#allocation2 + $0x1]]
    %v154 = vstv %s152
    %v155 = vstv %s153
    %v156 = vsel %vm148, %v154, %v155
    %v157 = vsel %vm149, %v154, %v155
    %v158 = vsel %vm150, %v154, %v155
    %v159 = vsel %vm151, %v154, %v155
    %v164 = vcombine.low %v156, %v157
    %v165 = vcombine.low %v158, %v159
    %v167 = vunpack.c.l.s4 1983009808
    %v168 = vunpack.c.0.s8 %v167
    %v169 = vlaneseq
    %v170 = vshrl.u32 %v169, 7
    %v171 = vsub.s32 %v168, %v170
    %v172 = vrot.slane %v164, %v171
    %v174 = vunpack.c.l.s4 1983009808
    %v175 = vunpack.c.0.s8 %v174
    %v176 = vlaneseq
    %v177 = vshrl.u32 %v176, 7
    %v178 = vsub.s32 %v175, %v177
    %v179 = vrot.slane %v165, %v178
    %v180 = vcombine.low %v172, %v179
    %v182 = vmul.f32 %v138, %v180
    %v183 = vadd.f32 %v27, %v182
    %184 = vst [vmem:[%s3] sm:$0xff] %v183
    // Predicated region
    $region18: #{image_downsampling_forward.1} parent=1 // pred_check
      _
    $region19: #{image_downsampling_forward.1} parent=1 // pred_check_branch
      %186 = sbr.rel (0) target = $region21
    $region20: #{image_downsampling_forward.1} parent=1 // pred_region
      _
    $region21: #{image_downsampling_forward.1} parent=1 // pred_fallthru
      _
    // Predicated region
    $region22: #{image_downsampling_forward.1} parent=1 // pred_check
      _
    $region23: #{image_downsampling_forward.1} parent=1 // pred_check_branch
      %188 = sbr.rel (0) target = $region25
    $region24: #{image_downsampling_forward.1} parent=1 // pred_region
      _
    $region25: #{image_downsampling_forward.1} parent=1 // pred_fallthru
      _
    %189 = vsyncpa [#allocation3], 1

</llo_original>
